<compile_context>
chip_gen: v6e
topology: v6e:2x2x1
jax: 0.10.0
libtpu: 0.0.40
codegen_flags: <defaults>
</compile_context>

<pallas_src>
import functools
import math

import jax
import jax.numpy as jnp
from jax import lax
from jax.experimental import pallas as pl
from jax.experimental.pallas import tpu as pltpu


def _round_up(x, m):
    return ((x + m - 1) // m) * m


def _vmem_capacity_bytes():
    try:
        return int(pltpu.get_tpu_info().vmem_capacity_bytes)
    except Exception:
        return 64 * 1024 * 1024        # conservative (v7x-sized) fallback


def _choose_tile_n(L, pad, pada, cin_p, cout_p, k, elem_bytes, *, tn_cap, budget):
    """Lane tile: multiple of 128, >= pad, sized to the per-generation budget."""
    tn_min = max(128, _round_up(pad, 128))
    tn = max(tn_min, min(_round_up(max(L, 1), 128), tn_cap))

    def footprint(tn_):
        blocks = 2 * tn_ * (cin_p * elem_bytes + cout_p * 4)     # 2x-buffered x / out
        carry = (cin_p + cout_p) * (pada + tn_) * elem_bytes     # xe + he
        stage = k * (cin_p + cout_p) * tn_ * elem_bytes          # xs1 + xs2
        return blocks + carry + stage

    while tn > tn_min and footprint(tn) > budget:
        tn -= 128
    return tn


# ------------------------------ Pallas kernel ------------------------------ #

def _temporal_block_kernel(x_ref, w1_ref, s1_ref, t1_ref, w2_ref, s2_ref, t2_ref,
                           *rest, k, d, pad, pada, has_ds):
    if has_ds:
        wds_ref, bds_ref, o_ref, xe_ref, he_ref, xs1_ref, xs2_ref = rest
    else:
        o_ref, xe_ref, he_ref, xs1_ref, xs2_ref = rest

    cin = xe_ref.shape[0]
    cout, tn = o_ref.shape
    stg = xe_ref.dtype
    t = pl.program_id(1)

    # ---- causal history carry: last `pad` columns of x and of conv1 act. ----
    if pad > 0:
        @pl.when(t == 0)
        def _():
            xe_ref[:, pada - pad:pada] = jnp.zeros((cin, pad), stg)
            he_ref[:, pada - pad:pada] = jnp.zeros((cout, pad), stg)

        @pl.when(t > 0)
        def _():
            xe_ref[:, pada - pad:pada] = xe_ref[:, pada - pad + tn:pada + tn]
            he_ref[:, pada - pad:pada] = he_ref[:, pada - pad + tn:pada + tn]

    # current x tile lands at a lane-aligned offset -> dense unmasked store
    xe_ref[:, pada:pada + tn] = x_ref[...].astype(stg)

    # ---- conv1: stack k dilated taps along sublanes -> one MXU matmul ----
    for j in range(k):
        off = pada - (k - 1 - j) * d
        xs1_ref[j * cin:(j + 1) * cin, :] = xe_ref[:, off:off + tn]
    h = jnp.dot(w1_ref[...], xs1_ref[...], preferred_element_type=jnp.float32)
    # conv bias is folded into the fused BN affine; dropout (eval) = identity
    h = jnp.maximum(h * s1_ref[...] + t1_ref[...], 0.0)
    he_ref[:, pada:pada + tn] = h.astype(stg)

    # ---- conv2: same tap trick, reading from the carried activation buffer ----
    for j in range(k):
        off = pada - (k - 1 - j) * d
        xs2_ref[j * cout:(j + 1) * cout, :] = he_ref[:, off:off + tn]
    h2 = jnp.dot(w2_ref[...], xs2_ref[...], preferred_element_type=jnp.float32)
    h2 = jnp.maximum(h2 * s2_ref[...] + t2_ref[...], 0.0)

    # ---- residual path: identity or fused 1x1 conv (downsample) ----
    if has_ds:
        res = jnp.dot(wds_ref[...], x_ref[...].astype(wds_ref.dtype),
                      preferred_element_type=jnp.float32) + bds_ref[...]
    else:
        res = x_ref[...].astype(jnp.float32)

    o_ref[...] = jnp.maximum(h2 + res, 0.0).astype(o_ref.dtype)


# -------------------------------- wrapper ----------------------------------- #

def temporal_block_forward(x, p, *, use_bf16=True, tile_n=None):
    """x: (B, Cin, L) float32 -> (B, Cout, L) float32 (eval-mode forward)."""
    B, Cin, L = x.shape
    k = int(p["kernel_size"])
    d = int(p["dilation"])
    assert int(p["stride"]) == 1, "only stride=1 is supported"
    assert int(p["padding"]) == (k - 1) * d, \
        "kernel assumes the standard TCN padding=(kernel_size-1)*dilation"
    Cout = p["w1"].shape[0]
    has_ds = p["wds"] is not None
    assert has_ds == (Cin != Cout)

    eps = 1e-5
    pad = (k - 1) * d
    pada = _round_up(pad, 128)                       # lane-aligned history region
    in_dtype = jnp.bfloat16 if use_bf16 else jnp.float32
    elem_bytes = 2 if use_bf16 else 4
    c_mult = 16 if use_bf16 else 8                   # sublane quantum per dtype
    Cin_p, Cout_p = _round_up(Cin, c_mult), _round_up(Cout, c_mult)

    # per-generation tile size / VMEM budget (v7x: 64 MiB physical VMEM)
    vmem_cap = _vmem_capacity_bytes()
    vmem_limit = max(32 << 20, min((vmem_cap * 3) // 4, 112 << 20))
    if tile_n is None:
        TN = _choose_tile_n(L, pad, pada, Cin_p, Cout_p, k, elem_bytes,
                            tn_cap=1024 if vmem_cap >= (100 << 20) else 512,
                            budget=vmem_limit // 2)
    else:
        TN = int(tile_n)
        assert TN % 128 == 0 and TN >= pad
    n_t = -(-L // TN)
    L_pad = n_t * TN

    # fused eval-BatchNorm affine (conv bias folded in), zero-padded channels
    def col(v):
        return jnp.zeros((Cout_p, 1), jnp.float32).at[:v.shape[0], 0].set(
            v.astype(jnp.float32))

    def fuse(b, g, beta, mean, var):
        s = g / jnp.sqrt(var + eps)
        t = beta - mean * s + s * b
        return col(s), col(t)

    s1, t1 = fuse(p["b1"], p["g1"], p["beta1"], p["mean1"], p["var1"])
    s2, t2 = fuse(p["b2"], p["g2"], p["beta2"], p["mean2"], p["var2"])

    # conv weights (Cout, Cin, k) -> (Cout_p, k*Cin_p); column j*Cin_p + c <-> tap j
    def stack_w(w, ci_p):
        co, ci, kk = w.shape
        wp = jnp.zeros((Cout_p, ci_p, kk), jnp.float32).at[:co, :ci, :].set(w)
        return jnp.transpose(wp, (0, 2, 1)).reshape(Cout_p, kk * ci_p).astype(in_dtype)

    w1r, w2r = stack_w(p["w1"], Cin_p), stack_w(p["w2"], Cout_p)

    # zero-pad channels (sublane alignment) and time (tile grid); ship as bf16
    xp = jnp.pad(x.astype(in_dtype), ((0, 0), (0, Cin_p - Cin), (0, L_pad - L)))

    const = lambda b, t: (0, 0)
    inputs = [xp, w1r, s1, t1, w2r, s2, t2]
    in_specs = [
        pl.BlockSpec((None, Cin_p, TN), lambda b, t: (b, 0, t)),
        pl.BlockSpec((Cout_p, k * Cin_p), const),
        pl.BlockSpec((Cout_p, 1), const),
        pl.BlockSpec((Cout_p, 1), const),
        pl.BlockSpec((Cout_p, k * Cout_p), const),
        pl.BlockSpec((Cout_p, 1), const),
        pl.BlockSpec((Cout_p, 1), const),
    ]
    if has_ds:
        wds = jnp.zeros((Cout_p, Cin_p), jnp.float32).at[:Cout, :Cin].set(
            p["wds"]).astype(in_dtype)
        inputs += [wds, col(p["bds"])]
        in_specs += [pl.BlockSpec((Cout_p, Cin_p), const),
                     pl.BlockSpec((Cout_p, 1), const)]

    out = pl.pallas_call(
        functools.partial(_temporal_block_kernel, k=k, d=d, pad=pad, pada=pada,
                          has_ds=has_ds),
        grid=(B, n_t),
        in_specs=in_specs,
        out_specs=pl.BlockSpec((None, Cout_p, TN), lambda b, t: (b, 0, t)),
        out_shape=jax.ShapeDtypeStruct((B, Cout_p, L_pad), jnp.float32),
        scratch_shapes=[pltpu.VMEM((Cin_p, pada + TN), in_dtype),    # x + history
                        pltpu.VMEM((Cout_p, pada + TN), in_dtype),   # conv1 act + hist
                        pltpu.VMEM((k * Cin_p, TN), in_dtype),       # conv1 tap stack
                        pltpu.VMEM((k * Cout_p, TN), in_dtype)],     # conv2 tap stack
        compiler_params=pltpu.CompilerParams(
            dimension_semantics=("parallel", "arbitrary"),
            vmem_limit_bytes=int(vmem_limit)),
    )(*inputs)

    return out[:, :Cout, :L]


# --------------------------- parameter creation ----------------------------- #

def init_temporal_block_params(key, n_inputs, n_outputs, kernel_size, stride,
                               dilation, padding):
    ks = jax.random.split(key, 14)

    def u(k_, shape, bound):
        return jax.random.uniform(k_, shape, jnp.float32, -bound, bound)

    b1 = 1.0 / math.sqrt(n_inputs * kernel_size)
    b2 = 1.0 / math.sqrt(n_outputs * kernel_size)
    p = dict(
        kernel_size=kernel_size, stride=stride, dilation=dilation, padding=padding,
        w1=u(ks[0], (n_outputs, n_inputs, kernel_size), b1),
        b1=u(ks[1], (n_outputs,), b1),
        w2=u(ks[2], (n_outputs, n_outputs, kernel_size), b2),
        b2=u(ks[3], (n_outputs,), b2),
        # eval-mode BatchNorm1d: non-trivial running stats / affine on purpose
        g1=1.0 + 0.1 * jax.random.normal(ks[4], (n_outputs,), jnp.float32),
        beta1=0.1 * jax.random.normal(ks[5], (n_outputs,), jnp.float32),
        mean1=0.1 * jax.random.normal(ks[6], (n_outputs,), jnp.float32),
        var1=0.8 + 0.4 * jax.random.uniform(ks[7], (n_outputs,), jnp.float32),
        g2=1.0 + 0.1 * jax.random.normal(ks[8], (n_outputs,), jnp.float32),
        beta2=0.1 * jax.random.normal(ks[9], (n_outputs,), jnp.float32),
        mean2=0.1 * jax.random.normal(ks[10], (n_outputs,), jnp.float32),
        var2=0.8 + 0.4 * jax.random.uniform(ks[11], (n_outputs,), jnp.float32),
    )
    if n_inputs != n_outputs:
        bd = 1.0 / math.sqrt(n_inputs)
        p["wds"] = u(ks[12], (n_outputs, n_inputs), bd)
        p["bds"] = u(ks[13], (n_outputs,), bd)
    else:
        p["wds"], p["bds"] = None, None
    return p


# --------------------------- pure-JAX reference ----------------------------- #

def reference_temporal_block(x, p):
    """Mirrors the PyTorch TemporalBlock.forward in eval mode (f32)."""
    d = p["dilation"]
    pad = p["padding"]
    s = p["stride"]
    eps = 1e-5

    def conv(inp, w, b):
        y = lax.conv_general_dilated(
            inp, w, window_strides=(s,), padding=[(pad, pad)], rhs_dilation=(d,),
            dimension_numbers=("NCH", "OIH", "NCH"))
        return y + b[None, :, None]

    def bn(inp, g, beta, mean, var):
        return ((inp - mean[None, :, None]) / jnp.sqrt(var[None, :, None] + eps)
                * g[None, :, None] + beta[None, :, None])

    out = jax.nn.relu(bn(conv(x, p["w1"], p["b1"]),
                         p["g1"], p["beta1"], p["mean1"], p["var1"]))
    out = jax.nn.relu(bn(conv(out, p["w2"], p["b2"]),
                         p["g2"], p["beta2"], p["mean2"], p["var2"]))
    if p["wds"] is not None:
        res = jnp.einsum("oc,bcl->bol", p["wds"], x) + p["bds"][None, :, None]
    else:
        res = x
    min_len = min(out.shape[-1], res.shape[-1])
    return jax.nn.relu(out[..., :min_len] + res[..., :min_len])


# ---------------------------------- main ------------------------------------ #

if __name__ == "__main__":
    key = jax.random.PRNGKey(0)
    # (B, L, n_inputs, n_outputs, kernel_size, dilation, tile_n)
    configs = [
        (2, 16, 4, 16, 3, 2, None),    # 1x1-downsample residual, single time tile
        (2, 16, 8, 8, 2, 1, None),     # identity residual, single time tile
        (2, 300, 8, 16, 3, 4, 128),    # multi-tile time axis: exercises the carry
    ]
    for (B, L, cin, cout, ksz, dil, tn) in configs:
        key, xk, pk = jax.random.split(key, 3)
        x = jax.random.normal(xk, (B, cin, L), dtype=jnp.float32)
        padding = (ksz - 1) * dil
        params = init_temporal_block_params(pk, cin, cout, ksz, 1, dil, padding)

        out = jax.block_until_ready(temporal_block_forward(x, params, tile_n=tn))
        ref = jax.block_until_ready(reference_temporal_block(x, params))

        assert out.shape == (B, cout, L), out.shape
        # bf16 inputs/weights (f32 accumulation) -> compare with loose tolerance
        assert jnp.allclose(out, ref, atol=5e-2, rtol=5e-2), \
            float(jnp.max(jnp.abs(out - ref)))

    print("KERNEL_OK")
</pallas_src>

<mosaic_0001>
module attributes {stable_mosaic.version = 11 : i64} {
  func.func @_temporal_block_kernel(%arg0: i32, %arg1: i32, %arg2: memref<1x16x128xbf16, #tpu.memory_space<vmem>>, %arg3: memref<16x48xbf16, #tpu.memory_space<vmem>>, %arg4: memref<16x1xf32, #tpu.memory_space<vmem>>, %arg5: memref<16x1xf32, #tpu.memory_space<vmem>>, %arg6: memref<16x48xbf16, #tpu.memory_space<vmem>>, %arg7: memref<16x1xf32, #tpu.memory_space<vmem>>, %arg8: memref<16x1xf32, #tpu.memory_space<vmem>>, %arg9: memref<16x16xbf16, #tpu.memory_space<vmem>>, %arg10: memref<16x1xf32, #tpu.memory_space<vmem>>, %arg11: memref<1x16x128xf32, #tpu.memory_space<vmem>>, %arg12: memref<16x256xbf16, #tpu.memory_space<vmem>>, %arg13: memref<16x256xbf16, #tpu.memory_space<vmem>>, %arg14: memref<48x128xbf16, #tpu.memory_space<vmem>>, %arg15: memref<48x128xbf16, #tpu.memory_space<vmem>>) attributes {dimension_semantics = [#tpu.dimension_semantics<parallel>, #tpu.dimension_semantics<arbitrary>], iteration_bounds = array<i64: 2, 1>, scalar_prefetch = 0 : i64, scratch_operands = 4 : i64, tpu.core_type = #tpu.core_type<tc>, window_params = [{transform_indices = @transform_0, window_bounds = array<i64: 1, 16, 128>}, {pipeline_mode = #tpu.pipeline_mode<synchronous>, transform_indices = @transform_1, window_bounds = array<i64: 16, 48>}, {pipeline_mode = #tpu.pipeline_mode<synchronous>, transform_indices = @transform_2, window_bounds = array<i64: 16, 1>}, {pipeline_mode = #tpu.pipeline_mode<synchronous>, transform_indices = @transform_3, window_bounds = array<i64: 16, 1>}, {pipeline_mode = #tpu.pipeline_mode<synchronous>, transform_indices = @transform_4, window_bounds = array<i64: 16, 48>}, {pipeline_mode = #tpu.pipeline_mode<synchronous>, transform_indices = @transform_5, window_bounds = array<i64: 16, 1>}, {pipeline_mode = #tpu.pipeline_mode<synchronous>, transform_indices = @transform_6, window_bounds = array<i64: 16, 1>}, {pipeline_mode = #tpu.pipeline_mode<synchronous>, transform_indices = @transform_7, window_bounds = array<i64: 16, 16>}, {pipeline_mode = #tpu.pipeline_mode<synchronous>, transform_indices = @transform_8, window_bounds = array<i64: 16, 1>}, {transform_indices = @transform_9, window_bounds = array<i64: 1, 16, 128>}]} {
    %c0_i32 = arith.constant 0 : i32
    %0 = arith.cmpi eq, %arg1, %c0_i32 : i32
    %1 = arith.extui %0 : i1 to i32
    %c0_i32_0 = arith.constant 0 : i32
    %2 = arith.cmpi ne, %1, %c0_i32_0 : i32
    scf.if %2 {
      %cst_59 = arith.constant 0.000000e+00 : bf16
      %58 = vector.broadcast %cst_59 : bf16 to vector<16x4xbf16>
      %c0_60 = arith.constant 0 : index
      %c124_61 = arith.constant 124 : index
      %59 = vector.load %arg12[%c0_60, %c124_61] : memref<16x256xbf16, #tpu.memory_space<vmem>>, vector<16x4xbf16>
      tpu.vector_store %arg12[%c0_60, %c124_61], %58 {strides = array<i32>} : memref<16x256xbf16, #tpu.memory_space<vmem>>, vector<16x4xbf16>,
      %cst_62 = arith.constant 0.000000e+00 : bf16
      %60 = vector.broadcast %cst_62 : bf16 to vector<16x4xbf16>
      %c0_63 = arith.constant 0 : index
      %c124_64 = arith.constant 124 : index
      %61 = vector.load %arg13[%c0_63, %c124_64] : memref<16x256xbf16, #tpu.memory_space<vmem>>, vector<16x4xbf16>
      tpu.vector_store %arg13[%c0_63, %c124_64], %60 {strides = array<i32>} : memref<16x256xbf16, #tpu.memory_space<vmem>>, vector<16x4xbf16>,
    } else {
    }
    %c0_i32_1 = arith.constant 0 : i32
    %3 = arith.cmpi sgt, %arg1, %c0_i32_1 : i32
    %4 = arith.extui %3 : i1 to i32
    %c0_i32_2 = arith.constant 0 : i32
    %5 = arith.cmpi ne, %4, %c0_i32_2 : i32
    scf.if %5 {
      %c0_59 = arith.constant 0 : index
      %c252 = arith.constant 252 : index
      %58 = vector.load %arg12[%c0_59, %c252] : memref<16x256xbf16, #tpu.memory_space<vmem>>, vector<16x4xbf16>
      %c0_60 = arith.constant 0 : index
      %c124_61 = arith.constant 124 : index
      %59 = vector.load %arg12[%c0_60, %c124_61] : memref<16x256xbf16, #tpu.memory_space<vmem>>, vector<16x4xbf16>
      tpu.vector_store %arg12[%c0_60, %c124_61], %58 {strides = array<i32>} : memref<16x256xbf16, #tpu.memory_space<vmem>>, vector<16x4xbf16>,
      %c0_62 = arith.constant 0 : index
      %c252_63 = arith.constant 252 : index
      %60 = vector.load %arg13[%c0_62, %c252_63] : memref<16x256xbf16, #tpu.memory_space<vmem>>, vector<16x4xbf16>
      %c0_64 = arith.constant 0 : index
      %c124_65 = arith.constant 124 : index
      %61 = vector.load %arg13[%c0_64, %c124_65] : memref<16x256xbf16, #tpu.memory_space<vmem>>, vector<16x4xbf16>
      tpu.vector_store %arg13[%c0_64, %c124_65], %60 {strides = array<i32>} : memref<16x256xbf16, #tpu.memory_space<vmem>>, vector<16x4xbf16>,
    } else {
    }
    %c0 = arith.constant 0 : index
    %c0_3 = arith.constant 0 : index
    %c0_4 = arith.constant 0 : index
    %6 = vector.load %arg2[%c0, %c0_3, %c0_4] : memref<1x16x128xbf16, #tpu.memory_space<vmem>>, vector<1x16x128xbf16>
    %7 = vector.shape_cast %6 : vector<1x16x128xbf16> to vector<16x128xbf16>
    %c0_5 = arith.constant 0 : index
    %c128 = arith.constant 128 : index
    %8 = vector.load %arg12[%c0_5, %c128] : memref<16x256xbf16, #tpu.memory_space<vmem>>, vector<16x128xbf16>
    tpu.vector_store %arg12[%c0_5, %c128], %7 {strides = array<i32>} : memref<16x256xbf16, #tpu.memory_space<vmem>>, vector<16x128xbf16>,
    %c0_6 = arith.constant 0 : index
    %c124 = arith.constant 124 : index
    %9 = vector.load %arg12[%c0_6, %c124] : memref<16x256xbf16, #tpu.memory_space<vmem>>, vector<16x128xbf16>
    %c0_7 = arith.constant 0 : index
    %c0_8 = arith.constant 0 : index
    %10 = vector.load %arg14[%c0_7, %c0_8] : memref<48x128xbf16, #tpu.memory_space<vmem>>, vector<16x128xbf16>
    tpu.vector_store %arg14[%c0_7, %c0_8], %9 {strides = array<i32>} : memref<48x128xbf16, #tpu.memory_space<vmem>>, vector<16x128xbf16>,
    %c0_9 = arith.constant 0 : index
    %c126 = arith.constant 126 : index
    %11 = vector.load %arg12[%c0_9, %c126] : memref<16x256xbf16, #tpu.memory_space<vmem>>, vector<16x128xbf16>
    %c16 = arith.constant 16 : index
    %c0_10 = arith.constant 0 : index
    %12 = vector.load %arg14[%c16, %c0_10] : memref<48x128xbf16, #tpu.memory_space<vmem>>, vector<16x128xbf16>
    tpu.vector_store %arg14[%c16, %c0_10], %11 {strides = array<i32>} : memref<48x128xbf16, #tpu.memory_space<vmem>>, vector<16x128xbf16>,
    %c0_11 = arith.constant 0 : index
    %c128_12 = arith.constant 128 : index
    %13 = vector.load %arg12[%c0_11, %c128_12] : memref<16x256xbf16, #tpu.memory_space<vmem>>, vector<16x128xbf16>
    %c32 = arith.constant 32 : index
    %c0_13 = arith.constant 0 : index
    %14 = vector.load %arg14[%c32, %c0_13] : memref<48x128xbf16, #tpu.memory_space<vmem>>, vector<16x128xbf16>
    tpu.vector_store %arg14[%c32, %c0_13], %13 {strides = array<i32>} : memref<48x128xbf16, #tpu.memory_space<vmem>>, vector<16x128xbf16>,
    %c0_14 = arith.constant 0 : index
    %c0_15 = arith.constant 0 : index
    %15 = vector.load %arg3[%c0_14, %c0_15] : memref<16x48xbf16, #tpu.memory_space<vmem>>, vector<16x48xbf16>
    %c0_16 = arith.constant 0 : index
    %c0_17 = arith.constant 0 : index
    %16 = vector.load %arg14[%c0_16, %c0_17] : memref<48x128xbf16, #tpu.memory_space<vmem>>, vector<48x128xbf16>
    %cst = arith.constant dense<0.000000e+00> : vector<16x128xf32>
    %17 = tpu.matmul %15, %16, %cst {dimension_numbers = #tpu.dot_dimension_numbers<[1], [0], [0], [1], [0, 0, 1, 1], [], []>} : vector<16x48xbf16>, vector<48x128xbf16>, vector<16x128xf32> -> vector<16x128xf32>
    %c0_18 = arith.constant 0 : index
    %c0_19 = arith.constant 0 : index
    %18 = vector.load %arg4[%c0_18, %c0_19] : memref<16x1xf32, #tpu.memory_space<vmem>>, vector<16x1xf32>
    %19 = vector.broadcast %18 : vector<16x1xf32> to vector<16x128xf32>
    %20 = arith.mulf %17, %19 : vector<16x128xf32>
    %c0_20 = arith.constant 0 : index
    %c0_21 = arith.constant 0 : index
    %21 = vector.load %arg5[%c0_20, %c0_21] : memref<16x1xf32, #tpu.memory_space<vmem>>, vector<16x1xf32>
    %22 = vector.broadcast %21 : vector<16x1xf32> to vector<16x128xf32>
    %23 = arith.addf %20, %22 : vector<16x128xf32>
    %cst_22 = arith.constant 0.000000e+00 : f32
    %24 = vector.broadcast %cst_22 : f32 to vector<16x128xf32>
    %25 = arith.maximumf %23, %24 : vector<16x128xf32>
    %26 = arith.truncf %25 : vector<16x128xf32> to vector<16x128xbf16>
    %c0_23 = arith.constant 0 : index
    %c128_24 = arith.constant 128 : index
    %27 = vector.load %arg13[%c0_23, %c128_24] : memref<16x256xbf16, #tpu.memory_space<vmem>>, vector<16x128xbf16>
    tpu.vector_store %arg13[%c0_23, %c128_24], %26 {strides = array<i32>} : memref<16x256xbf16, #tpu.memory_space<vmem>>, vector<16x128xbf16>,
    %c0_25 = arith.constant 0 : index
    %c124_26 = arith.constant 124 : index
    %28 = vector.load %arg13[%c0_25, %c124_26] : memref<16x256xbf16, #tpu.memory_space<vmem>>, vector<16x128xbf16>
    %c0_27 = arith.constant 0 : index
    %c0_28 = arith.constant 0 : index
    %29 = vector.load %arg15[%c0_27, %c0_28] : memref<48x128xbf16, #tpu.memory_space<vmem>>, vector<16x128xbf16>
    tpu.vector_store %arg15[%c0_27, %c0_28], %28 {strides = array<i32>} : memref<48x128xbf16, #tpu.memory_space<vmem>>, vector<16x128xbf16>,
    %c0_29 = arith.constant 0 : index
    %c126_30 = arith.constant 126 : index
    %30 = vector.load %arg13[%c0_29, %c126_30] : memref<16x256xbf16, #tpu.memory_space<vmem>>, vector<16x128xbf16>
    %c16_31 = arith.constant 16 : index
    %c0_32 = arith.constant 0 : index
    %31 = vector.load %arg15[%c16_31, %c0_32] : memref<48x128xbf16, #tpu.memory_space<vmem>>, vector<16x128xbf16>
    tpu.vector_store %arg15[%c16_31, %c0_32], %30 {strides = array<i32>} : memref<48x128xbf16, #tpu.memory_space<vmem>>, vector<16x128xbf16>,
    %c0_33 = arith.constant 0 : index
    %c128_34 = arith.constant 128 : index
    %32 = vector.load %arg13[%c0_33, %c128_34] : memref<16x256xbf16, #tpu.memory_space<vmem>>, vector<16x128xbf16>
    %c32_35 = arith.constant 32 : index
    %c0_36 = arith.constant 0 : index
    %33 = vector.load %arg15[%c32_35, %c0_36] : memref<48x128xbf16, #tpu.memory_space<vmem>>, vector<16x128xbf16>
    tpu.vector_store %arg15[%c32_35, %c0_36], %32 {strides = array<i32>} : memref<48x128xbf16, #tpu.memory_space<vmem>>, vector<16x128xbf16>,
    %c0_37 = arith.constant 0 : index
    %c0_38 = arith.constant 0 : index
    %34 = vector.load %arg6[%c0_37, %c0_38] : memref<16x48xbf16, #tpu.memory_space<vmem>>, vector<16x48xbf16>
    %c0_39 = arith.constant 0 : index
    %c0_40 = arith.constant 0 : index
    %35 = vector.load %arg15[%c0_39, %c0_40] : memref<48x128xbf16, #tpu.memory_space<vmem>>, vector<48x128xbf16>
    %cst_41 = arith.constant dense<0.000000e+00> : vector<16x128xf32>
    %36 = tpu.matmul %34, %35, %cst_41 {dimension_numbers = #tpu.dot_dimension_numbers<[1], [0], [0], [1], [0, 0, 1, 1], [], []>} : vector<16x48xbf16>, vector<48x128xbf16>, vector<16x128xf32> -> vector<16x128xf32>
    %c0_42 = arith.constant 0 : index
    %c0_43 = arith.constant 0 : index
    %37 = vector.load %arg7[%c0_42, %c0_43] : memref<16x1xf32, #tpu.memory_space<vmem>>, vector<16x1xf32>
    %38 = vector.broadcast %37 : vector<16x1xf32> to vector<16x128xf32>
    %39 = arith.mulf %36, %38 : vector<16x128xf32>
    %c0_44 = arith.constant 0 : index
    %c0_45 = arith.constant 0 : index
    %40 = vector.load %arg8[%c0_44, %c0_45] : memref<16x1xf32, #tpu.memory_space<vmem>>, vector<16x1xf32>
    %41 = vector.broadcast %40 : vector<16x1xf32> to vector<16x128xf32>
    %42 = arith.addf %39, %41 : vector<16x128xf32>
    %cst_46 = arith.constant 0.000000e+00 : f32
    %43 = vector.broadcast %cst_46 : f32 to vector<16x128xf32>
    %44 = arith.maximumf %42, %43 : vector<16x128xf32>
    %c0_47 = arith.constant 0 : index
    %c0_48 = arith.constant 0 : index
    %45 = vector.load %arg9[%c0_47, %c0_48] : memref<16x16xbf16, #tpu.memory_space<vmem>>, vector<16x16xbf16>
    %c0_49 = arith.constant 0 : index
    %c0_50 = arith.constant 0 : index
    %c0_51 = arith.constant 0 : index
    %46 = vector.load %arg2[%c0_49, %c0_50, %c0_51] : memref<1x16x128xbf16, #tpu.memory_space<vmem>>, vector<1x16x128xbf16>
    %47 = vector.shape_cast %46 : vector<1x16x128xbf16> to vector<16x128xbf16>
    %cst_52 = arith.constant dense<0.000000e+00> : vector<16x128xf32>
    %48 = tpu.matmul %45, %47, %cst_52 {dimension_numbers = #tpu.dot_dimension_numbers<[1], [0], [0], [1], [0, 0, 1, 1], [], []>} : vector<16x16xbf16>, vector<16x128xbf16>, vector<16x128xf32> -> vector<16x128xf32>
    %c0_53 = arith.constant 0 : index
    %c0_54 = arith.constant 0 : index
    %49 = vector.load %arg10[%c0_53, %c0_54] : memref<16x1xf32, #tpu.memory_space<vmem>>, vector<16x1xf32>
    %50 = vector.broadcast %49 : vector<16x1xf32> to vector<16x128xf32>
    %51 = arith.addf %48, %50 : vector<16x128xf32>
    %52 = arith.addf %44, %51 : vector<16x128xf32>
    %cst_55 = arith.constant 0.000000e+00 : f32
    %53 = vector.broadcast %cst_55 : f32 to vector<16x128xf32>
    %54 = arith.maximumf %52, %53 : vector<16x128xf32>
    %c0_56 = arith.constant 0 : index
    %c0_57 = arith.constant 0 : index
    %c0_58 = arith.constant 0 : index
    %55 = vector.load %arg11[%c0_56, %c0_57, %c0_58] : memref<1x16x128xf32, #tpu.memory_space<vmem>>, vector<1x16x128xf32>
    %56 = vector.shape_cast %55 : vector<1x16x128xf32> to vector<16x128xf32>
    %57 = vector.shape_cast %54 : vector<16x128xf32> to vector<1x16x128xf32>
    tpu.vector_store %arg11[%c0_56, %c0_57, %c0_58], %57 {strides = array<i32>} : memref<1x16x128xf32, #tpu.memory_space<vmem>>, vector<1x16x128xf32>,
    return
  }
  func.func @transform_0(%arg0: i32, %arg1: i32) -> (i32, i32, i32) {
    %c0_i32 = arith.constant 0 : i32
    %c0_i32_0 = arith.constant 0 : i32
    return %arg0, %c0_i32, %arg1 : i32, i32, i32
  }
  func.func @transform_1(%arg0: i32, %arg1: i32) -> (i32, i32) {
    %c0_i32 = arith.constant 0 : i32
    %c0_i32_0 = arith.constant 0 : i32
    %c0_i32_1 = arith.constant 0 : i32
    return %c0_i32, %c0_i32_0 : i32, i32
  }
  func.func @transform_2(%arg0: i32, %arg1: i32) -> (i32, i32) {
    %c0_i32 = arith.constant 0 : i32
    %c0_i32_0 = arith.constant 0 : i32
    %c0_i32_1 = arith.constant 0 : i32
    return %c0_i32, %c0_i32_0 : i32, i32
  }
  func.func @transform_3(%arg0: i32, %arg1: i32) -> (i32, i32) {
    %c0_i32 = arith.constant 0 : i32
    %c0_i32_0 = arith.constant 0 : i32
    %c0_i32_1 = arith.constant 0 : i32
    return %c0_i32, %c0_i32_0 : i32, i32
  }
  func.func @transform_4(%arg0: i32, %arg1: i32) -> (i32, i32) {
    %c0_i32 = arith.constant 0 : i32
    %c0_i32_0 = arith.constant 0 : i32
    %c0_i32_1 = arith.constant 0 : i32
    return %c0_i32, %c0_i32_0 : i32, i32
  }
  func.func @transform_5(%arg0: i32, %arg1: i32) -> (i32, i32) {
    %c0_i32 = arith.constant 0 : i32
    %c0_i32_0 = arith.constant 0 : i32
    %c0_i32_1 = arith.constant 0 : i32
    return %c0_i32, %c0_i32_0 : i32, i32
  }
  func.func @transform_6(%arg0: i32, %arg1: i32) -> (i32, i32) {
    %c0_i32 = arith.constant 0 : i32
    %c0_i32_0 = arith.constant 0 : i32
    %c0_i32_1 = arith.constant 0 : i32
    return %c0_i32, %c0_i32_0 : i32, i32
  }
  func.func @transform_7(%arg0: i32, %arg1: i32) -> (i32, i32) {
    %c0_i32 = arith.constant 0 : i32
    %c0_i32_0 = arith.constant 0 : i32
    %c0_i32_1 = arith.constant 0 : i32
    return %c0_i32, %c0_i32_0 : i32, i32
  }
  func.func @transform_8(%arg0: i32, %arg1: i32) -> (i32, i32) {
    %c0_i32 = arith.constant 0 : i32
    %c0_i32_0 = arith.constant 0 : i32
    %c0_i32_1 = arith.constant 0 : i32
    return %c0_i32, %c0_i32_0 : i32, i32
  }
  func.func @transform_9(%arg0: i32, %arg1: i32) -> (i32, i32, i32) {
    %c0_i32 = arith.constant 0 : i32
    %c0_i32_0 = arith.constant 0 : i32
    return %arg0, %c0_i32, %arg1 : i32, i32, i32
  }
}

</mosaic_0001>

<llo_original>
// kernel: tpu_custom_call.1
$region0: #{tpu_custom_call.1}
  #allocation0 [shape = 'u32[]', space=smem, size = 0x4, offset = 0x4, fixed_abs, tag = 'smem constant byte address 0x4 - core index']
  #allocation1 [shape = 'u32[144,128]{1,0:T(1,128)}', space=vmem, size = 0x12000, scoped, tag = 'internal scratch']
  #allocation2 [shape = 'bf16[16,256]{1,0:T(8,128)(2,1)}', space=vmem, size = 0x2000, scoped, tag = 'scratch operand']
  #allocation3 [shape = 'bf16[16,256]{1,0:T(8,128)(2,1)}', space=vmem, size = 0x2000, scoped, tag = 'scratch operand']
  #allocation4 [shape = 'bf16[48,128]{1,0:T(8,128)(2,1)}', space=vmem, size = 0x3000, scoped, tag = 'scratch operand']
  #allocation5 [shape = 'bf16[48,128]{1,0:T(8,128)(2,1)}', space=vmem, size = 0x3000, scoped, tag = 'scratch operand']
  %s0 = inlined_call_operand.vmem [shape: bf16[2,16,128], index: 0, kind: input, shape index: {}]
  %s1 = inlined_call_operand.vmem [shape: bf16[16,48], index: 1, kind: input, shape index: {}]
  %s2 = inlined_call_operand.vmem [shape: f32[16,1], index: 2, kind: input, shape index: {}]
  %s3 = inlined_call_operand.vmem [shape: f32[16,1], index: 3, kind: input, shape index: {}]
  %s4 = inlined_call_operand.vmem [shape: bf16[16,48], index: 4, kind: input, shape index: {}]
  %s5 = inlined_call_operand.vmem [shape: f32[16,1], index: 5, kind: input, shape index: {}]
  %s6 = inlined_call_operand.vmem [shape: f32[16,1], index: 6, kind: input, shape index: {}]
  %s7 = inlined_call_operand.vmem [shape: bf16[16,16], index: 7, kind: input, shape index: {}]
  %s8 = inlined_call_operand.vmem [shape: f32[16,1], index: 8, kind: input, shape index: {}]
  %s9 = inlined_call_operand.hbm [shape: f32[2,16,128], index: 9, kind: output, shape index: {}]
  %s10 = sld [smem:[#allocation0]]
  $region77: #{tpu_custom_call.1} parent=0
    _
  %s12 = ssub.s32 1, %s10
  %s13 = scalar_select 0, %s12, %s10
  $region1: #{tpu_custom_call.1} parent=0
    #allocation6 [shape = 'u8[16384]{0}', space=vmem, size = 0x4000, scoped, tag = 'output window, operand 0']
    #allocation7 [shape = 's32[2]{0}', space=sflag, size = 0x8, scoped, tag = 'scoped memory for tpu_custom_call.1']
    %14 = vsyncpa [#allocation7], 0
    %s15 = scalar_lea.sflag [#allocation7], 1
    %16 = vsyncpa %s15, 0
    loop: start=0, step=1, limit=4
    $region2: #{tpu_custom_call.1} parent=1 // loop_pre_header
      _
    $region3: #{tpu_custom_call.1} parent=1 // loop_header
      %s18 = sphi 0, %s22
      %p19 = scmp.ge.s32.totalorder %s18, 4
      %s25 = sphi 0, %s37
      %s26 = sphi 0, %s33
      %s27 = sphi 0, %s25
      %s28 = sphi 0, %s26
      %s29 = sphi 0, %s27
      %s30 = sphi 0, %s28
      %s42 = sphi 0, %s44
      %s45 = sphi 0, %s42
      %s46 = sphi 0, %s45
      %s62 = sphi 0, %s46
      %s66 = sphi 0, %s66
      %s68 = sphi 0, %s66
      %s69 = sphi 0, %s68
      %s83 = sphi 0, %s69
      %s87 = sphi 0, %s87
      %s89 = sphi 0, %s87
      %s90 = sphi 0, %s89
      %s104 = sphi 0, %s90
      %s108 = sphi 0, %s108
      %s110 = sphi 0, %s108
      %s111 = sphi 0, %s110
      %s125 = sphi 0, %s111
      %s129 = sphi 0, %s129
      %s131 = sphi 0, %s129
      %s132 = sphi 0, %s131
      %s146 = sphi 0, %s132
      %s150 = sphi 0, %s150
      %s152 = sphi 0, %s150
      %s153 = sphi 0, %s152
      %s167 = sphi 0, %s153
      %s171 = sphi 0, %s171
      %s173 = sphi 0, %s171
      %s174 = sphi 0, %s173
      %s188 = sphi 0, %s174
      %s192 = sphi 0, %s192
      %s194 = sphi 0, %s192
      %s195 = sphi 0, %s194
      %s209 = sphi 0, %s195
      %s213 = sphi 0, %s213
      %s215 = sphi 0, %s213
      %s216 = sphi 0, %s215
      %s230 = sphi 0, %s216
      %s238 = sphi 0, %s240
      %s241 = sphi 0, %s238
      %s242 = sphi 0, %s241
      %s258 = sphi 0, %s242
    $region4: #{tpu_custom_call.1} parent=1 // loop_header_branch
      %21 = sbr.rel (%p19) target = $region8
    $region5: #{tpu_custom_call.1} parent=1 // loop_body
      %s23 = ssub.s32 %s18, 1
      %s24 = ssub.s32 %s18, 2
      %s31 = sadd.s32 1, %s26
      %p32 = scmp.ge.s32.totalorder %s31, 1
      %s33 = scalar_select %p32, 0, %s31
      %s34 = sadd.s32 1, %s25
      %s35 = scalar_select %p32, %s34, %s25
      %p36 = scmp.ge.s32.totalorder %s35, 2
      %s37 = scalar_select %p36, 0, %s35
      %s38 = ssub.s32 %s25, %s37
      %s39 = ssub.s32 %s26, %s33
      %s40 = sor.u32 %s38, %s39
      %p41 = scmp.eq.s32.totalorder %s40, 0
      %s43 = sadd.s32 %s42, 1
      %s44 = scalar_select %p41, %s42, %s43
      %p47 = pneg %p41
      %p48 = scmp.eq.s32.totalorder %s18, 1
      %p49 = por %p47, %p48
      %p50 = scmp.ne.s32.totalorder %s42, %s45
      %p51 = scmp.eq.s32.totalorder %s18, 0
      %p52 = por %p50, %p51
      %p53 = scmp.ne.s32.totalorder %s42, %s45
      %p54 = scmp.eq.s32.totalorder %s23, 1
      %p55 = por %p53, %p54
      %p56 = scmp.ne.s32.totalorder %s45, %s46
      %p57 = scmp.eq.s32.totalorder %s23, 0
      %p58 = por %p56, %p57
      %p59 = scmp.ne.s32.totalorder %s45, %s46
      %p60 = scmp.eq.s32.totalorder %s24, 1
      %p61 = por %p59, %p60
      %p63 = scmp.ne.s32.totalorder %s46, %s62
      %p64 = scmp.eq.s32.totalorder %s24, 0
      %p65 = por %p63, %p64
      %s67 = sadd.s32 %s66, 1
      %p70 = scmp.eq.s32.totalorder %s18, 1
      %p71 = scmp.ne.s32.totalorder %s66, %s68
      %p72 = scmp.eq.s32.totalorder %s18, 0
      %p73 = por %p71, %p72
      %p74 = scmp.ne.s32.totalorder %s66, %s68
      %p75 = scmp.eq.s32.totalorder %s23, 1
      %p76 = por %p74, %p75
      %p77 = scmp.ne.s32.totalorder %s68, %s69
      %p78 = scmp.eq.s32.totalorder %s23, 0
      %p79 = por %p77, %p78
      %p80 = scmp.ne.s32.totalorder %s68, %s69
      %p81 = scmp.eq.s32.totalorder %s24, 1
      %p82 = por %p80, %p81
      %p84 = scmp.ne.s32.totalorder %s69, %s83
      %p85 = scmp.eq.s32.totalorder %s24, 0
      %p86 = por %p84, %p85
      %s88 = sadd.s32 %s87, 1
      %p91 = scmp.eq.s32.totalorder %s18, 1
      %p92 = scmp.ne.s32.totalorder %s87, %s89
      %p93 = scmp.eq.s32.totalorder %s18, 0
      %p94 = por %p92, %p93
      %p95 = scmp.ne.s32.totalorder %s87, %s89
      %p96 = scmp.eq.s32.totalorder %s23, 1
      %p97 = por %p95, %p96
      %p98 = scmp.ne.s32.totalorder %s89, %s90
      %p99 = scmp.eq.s32.totalorder %s23, 0
      %p100 = por %p98, %p99
      %p101 = scmp.ne.s32.totalorder %s89, %s90
      %p102 = scmp.eq.s32.totalorder %s24, 1
      %p103 = por %p101, %p102
      %p105 = scmp.ne.s32.totalorder %s90, %s104
      %p106 = scmp.eq.s32.totalorder %s24, 0
      %p107 = por %p105, %p106
      %s109 = sadd.s32 %s108, 1
      %p112 = scmp.eq.s32.totalorder %s18, 1
      %p113 = scmp.ne.s32.totalorder %s108, %s110
      %p114 = scmp.eq.s32.totalorder %s18, 0
      %p115 = por %p113, %p114
      %p116 = scmp.ne.s32.totalorder %s108, %s110
      %p117 = scmp.eq.s32.totalorder %s23, 1
      %p118 = por %p116, %p117
      %p119 = scmp.ne.s32.totalorder %s110, %s111
      %p120 = scmp.eq.s32.totalorder %s23, 0
      %p121 = por %p119, %p120
      %p122 = scmp.ne.s32.totalorder %s110, %s111
      %p123 = scmp.eq.s32.totalorder %s24, 1
      %p124 = por %p122, %p123
      %p126 = scmp.ne.s32.totalorder %s111, %s125
      %p127 = scmp.eq.s32.totalorder %s24, 0
      %p128 = por %p126, %p127
      %s130 = sadd.s32 %s129, 1
      %p133 = scmp.eq.s32.totalorder %s18, 1
      %p134 = scmp.ne.s32.totalorder %s129, %s131
      %p135 = scmp.eq.s32.totalorder %s18, 0
      %p136 = por %p134, %p135
      %p137 = scmp.ne.s32.totalorder %s129, %s131
      %p138 = scmp.eq.s32.totalorder %s23, 1
      %p139 = por %p137, %p138
      %p140 = scmp.ne.s32.totalorder %s131, %s132
      %p141 = scmp.eq.s32.totalorder %s23, 0
      %p142 = por %p140, %p141
      %p143 = scmp.ne.s32.totalorder %s131, %s132
      %p144 = scmp.eq.s32.totalorder %s24, 1
      %p145 = por %p143, %p144
      %p147 = scmp.ne.s32.totalorder %s132, %s146
      %p148 = scmp.eq.s32.totalorder %s24, 0
      %p149 = por %p147, %p148
      %s151 = sadd.s32 %s150, 1
      %p154 = scmp.eq.s32.totalorder %s18, 1
      %p155 = scmp.ne.s32.totalorder %s150, %s152
      %p156 = scmp.eq.s32.totalorder %s18, 0
      %p157 = por %p155, %p156
      %p158 = scmp.ne.s32.totalorder %s150, %s152
      %p159 = scmp.eq.s32.totalorder %s23, 1
      %p160 = por %p158, %p159
      %p161 = scmp.ne.s32.totalorder %s152, %s153
      %p162 = scmp.eq.s32.totalorder %s23, 0
      %p163 = por %p161, %p162
      %p164 = scmp.ne.s32.totalorder %s152, %s153
      %p165 = scmp.eq.s32.totalorder %s24, 1
      %p166 = por %p164, %p165
      %p168 = scmp.ne.s32.totalorder %s153, %s167
      %p169 = scmp.eq.s32.totalorder %s24, 0
      %p170 = por %p168, %p169
      %s172 = sadd.s32 %s171, 1
      %p175 = scmp.eq.s32.totalorder %s18, 1
      %p176 = scmp.ne.s32.totalorder %s171, %s173
      %p177 = scmp.eq.s32.totalorder %s18, 0
      %p178 = por %p176, %p177
      %p179 = scmp.ne.s32.totalorder %s171, %s173
      %p180 = scmp.eq.s32.totalorder %s23, 1
      %p181 = por %p179, %p180
      %p182 = scmp.ne.s32.totalorder %s173, %s174
      %p183 = scmp.eq.s32.totalorder %s23, 0
      %p184 = por %p182, %p183
      %p185 = scmp.ne.s32.totalorder %s173, %s174
      %p186 = scmp.eq.s32.totalorder %s24, 1
      %p187 = por %p185, %p186
      %p189 = scmp.ne.s32.totalorder %s174, %s188
      %p190 = scmp.eq.s32.totalorder %s24, 0
      %p191 = por %p189, %p190
      %s193 = sadd.s32 %s192, 1
      %p196 = scmp.eq.s32.totalorder %s18, 1
      %p197 = scmp.ne.s32.totalorder %s192, %s194
      %p198 = scmp.eq.s32.totalorder %s18, 0
      %p199 = por %p197, %p198
      %p200 = scmp.ne.s32.totalorder %s192, %s194
      %p201 = scmp.eq.s32.totalorder %s23, 1
      %p202 = por %p200, %p201
      %p203 = scmp.ne.s32.totalorder %s194, %s195
      %p204 = scmp.eq.s32.totalorder %s23, 0
      %p205 = por %p203, %p204
      %p206 = scmp.ne.s32.totalorder %s194, %s195
      %p207 = scmp.eq.s32.totalorder %s24, 1
      %p208 = por %p206, %p207
      %p210 = scmp.ne.s32.totalorder %s195, %s209
      %p211 = scmp.eq.s32.totalorder %s24, 0
      %p212 = por %p210, %p211
      %s214 = sadd.s32 %s213, 1
      %p217 = scmp.eq.s32.totalorder %s18, 1
      %p218 = scmp.ne.s32.totalorder %s213, %s215
      %p219 = scmp.eq.s32.totalorder %s18, 0
      %p220 = por %p218, %p219
      %p221 = scmp.ne.s32.totalorder %s213, %s215
      %p222 = scmp.eq.s32.totalorder %s23, 1
      %p223 = por %p221, %p222
      %p224 = scmp.ne.s32.totalorder %s215, %s216
      %p225 = scmp.eq.s32.totalorder %s23, 0
      %p226 = por %p224, %p225
      %p227 = scmp.ne.s32.totalorder %s215, %s216
      %p228 = scmp.eq.s32.totalorder %s24, 1
      %p229 = por %p227, %p228
      %p231 = scmp.ne.s32.totalorder %s216, %s230
      %p232 = scmp.eq.s32.totalorder %s24, 0
      %p233 = por %p231, %p232
      %s234 = ssub.s32 %s25, %s37
      %s235 = ssub.s32 %s26, %s33
      %s236 = sor.u32 %s234, %s235
      %p237 = scmp.eq.s32.totalorder %s236, 0
      %s239 = sadd.s32 %s238, 1
      %s240 = scalar_select %p237, %s238, %s239
      %p243 = pneg %p237
      %p244 = scmp.eq.s32.totalorder %s18, 1
      %p245 = por %p243, %p244
      %p246 = scmp.ne.s32.totalorder %s238, %s241
      %p247 = scmp.eq.s32.totalorder %s18, 0
      %p248 = por %p246, %p247
      %p249 = scmp.ne.s32.totalorder %s238, %s241
      %p250 = scmp.eq.s32.totalorder %s23, 1
      %p251 = por %p249, %p250
      %p252 = scmp.ne.s32.totalorder %s241, %s242
      %p253 = scmp.eq.s32.totalorder %s23, 0
      %p254 = por %p252, %p253
      %p255 = scmp.ne.s32.totalorder %s241, %s242
      %p256 = scmp.eq.s32.totalorder %s24, 1
      %p257 = por %p255, %p256
      %p259 = scmp.ne.s32.totalorder %s242, %s258
      %p260 = scmp.eq.s32.totalorder %s24, 0
      %p261 = por %p259, %p260
      %p262 = scmp.le.s32.totalorder 1, %s18
      %p263 = scmp.lt.s32.totalorder %s18, 3
      %p264 = pnand %p262, %p263
      %p265 = pneg %p264
      // Predicated region
      $region9: #{tpu_custom_call.1} parent=5 // pred_check
        _
      $region10: #{tpu_custom_call.1} parent=5 // pred_check_branch
        %267 = sbr.rel (%p264) target = $region12
      $region11: #{tpu_custom_call.1} parent=5 // pred_region
        %s268 = ssub.s32 %s18, 1
        // Predicated region
        $region13: #{tpu_custom_call.1} parent=11 // pred_check
          %p269 = pneg %p79
        $region14: #{tpu_custom_call.1} parent=11 // pred_check_branch
          %271 = sbr.rel (%p269) target = $region16
        $region15: #{tpu_custom_call.1} parent=11 // pred_region
          _
        $region16: #{tpu_custom_call.1} parent=11 // pred_fallthru
          _
        // Predicated region
        $region17: #{tpu_custom_call.1} parent=11 // pred_check
          %p272 = pneg %p100
        $region18: #{tpu_custom_call.1} parent=11 // pred_check_branch
          %274 = sbr.rel (%p272) target = $region20
        $region19: #{tpu_custom_call.1} parent=11 // pred_region
          _
        $region20: #{tpu_custom_call.1} parent=11 // pred_fallthru
          _
        // Predicated region
        $region21: #{tpu_custom_call.1} parent=11 // pred_check
          %p275 = pneg %p121
        $region22: #{tpu_custom_call.1} parent=11 // pred_check_branch
          %277 = sbr.rel (%p275) target = $region24
        $region23: #{tpu_custom_call.1} parent=11 // pred_region
          _
        $region24: #{tpu_custom_call.1} parent=11 // pred_fallthru
          _
        // Predicated region
        $region25: #{tpu_custom_call.1} parent=11 // pred_check
          %p278 = pneg %p142
        $region26: #{tpu_custom_call.1} parent=11 // pred_check_branch
          %280 = sbr.rel (%p278) target = $region28
        $region27: #{tpu_custom_call.1} parent=11 // pred_region
          _
        $region28: #{tpu_custom_call.1} parent=11 // pred_fallthru
          _
        // Predicated region
        $region29: #{tpu_custom_call.1} parent=11 // pred_check
          %p281 = pneg %p163
        $region30: #{tpu_custom_call.1} parent=11 // pred_check_branch
          %283 = sbr.rel (%p281) target = $region32
        $region31: #{tpu_custom_call.1} parent=11 // pred_region
          _
        $region32: #{tpu_custom_call.1} parent=11 // pred_fallthru
          _
        // Predicated region
        $region33: #{tpu_custom_call.1} parent=11 // pred_check
          %p284 = pneg %p184
        $region34: #{tpu_custom_call.1} parent=11 // pred_check_branch
          %286 = sbr.rel (%p284) target = $region36
        $region35: #{tpu_custom_call.1} parent=11 // pred_region
          _
        $region36: #{tpu_custom_call.1} parent=11 // pred_fallthru
          _
        // Predicated region
        $region37: #{tpu_custom_call.1} parent=11 // pred_check
          %p287 = pneg %p205
        $region38: #{tpu_custom_call.1} parent=11 // pred_check_branch
          %289 = sbr.rel (%p287) target = $region40
        $region39: #{tpu_custom_call.1} parent=11 // pred_region
          _
        $region40: #{tpu_custom_call.1} parent=11 // pred_fallthru
          _
        // Predicated region
        $region41: #{tpu_custom_call.1} parent=11 // pred_check
          %p290 = pneg %p226
        $region42: #{tpu_custom_call.1} parent=11 // pred_check_branch
          %292 = sbr.rel (%p290) target = $region44
        $region43: #{tpu_custom_call.1} parent=11 // pred_region
          _
        $region44: #{tpu_custom_call.1} parent=11 // pred_fallthru
          _
      $region12: #{tpu_custom_call.1} parent=5 // pred_fallthru
        _
      %p293 = scmp.lt.s32.totalorder %s18, 2
      // Predicated region
      $region45: #{tpu_custom_call.1} parent=5 // pred_check
        %p294 = pneg %p293
      $region46: #{tpu_custom_call.1} parent=5 // pred_check_branch
        %296 = sbr.rel (%p294) target = $region48
      $region47: #{tpu_custom_call.1} parent=5 // pred_region
        // Predicated region
        $region49: #{tpu_custom_call.1} parent=47 // pred_check
          %p297 = pneg %p52
        $region50: #{tpu_custom_call.1} parent=47 // pred_check_branch
          %299 = sbr.rel (%p297) target = $region52
        $region51: #{tpu_custom_call.1} parent=47 // pred_region
          %p300 = scmp.lt.s32.totalorder %s25, 1
          %s301 = scalar_select %p300, %s25, 1
          %p302 = scmp.lt.s32.totalorder %s26, 0
          %s303 = scalar_select %p302, %s26, 0
          %s304 = smul.addr %s301, 2
          %s305 = sadd.s32 %s303, %s304
          %s306 = smul.addr %s305, 4
          %s307 = scalar_lea.vmem %s0, %s306
        $region52: #{tpu_custom_call.1} parent=47 // pred_fallthru
          _
      $region48: #{tpu_custom_call.1} parent=5 // pred_fallthru
        _
      %p308 = scmp.le.s32.totalorder 1, %s18
      %p309 = scmp.lt.s32.totalorder %s18, 3
      %p310 = pnand %p308, %p309
      %p311 = pneg %p310
      // Predicated region
      $region53: #{tpu_custom_call.1} parent=5 // pred_check
        _
      $region54: #{tpu_custom_call.1} parent=5 // pred_check_branch
        %313 = sbr.rel (%p310) target = $region56
      $region55: #{tpu_custom_call.1} parent=5 // pred_region
        %s314 = ssub.s32 %s18, 1
        %p315 = scmp.lt.s32.totalorder %s27, 1
        %s316 = scalar_select %p315, %s27, 1
        %p317 = scmp.lt.s32.totalorder %s28, 0
        %s318 = scalar_select %p317, %s28, 0
        %s319 = smul.addr %s316, 2
        %s320 = sadd.s32 %s318, %s319
        %s321 = smul.addr %s320, 4
        %s322 = scalar_lea.vmem %s0, %s321
        %p323 = pneg %p58
        %p324 = pneg %p55
        %p325 = pneg %p79
        %p326 = pneg %p76
        %p327 = pneg %p100
        %p328 = pneg %p97
        %p329 = pneg %p121
        %p330 = pneg %p118
        %p331 = pneg %p142
        %p332 = pneg %p139
        %p333 = pneg %p163
        %p334 = pneg %p160
        %p335 = pneg %p184
        %p336 = pneg %p181
        %p337 = pneg %p205
        %p338 = pneg %p202
        %p339 = pneg %p226
        %p340 = pneg %p223
        %p341 = pneg %p254
        %p342 = pneg %p251
        %s343 = sand.u32 %s241, 1
        %s344 = scalar_lea.sflag [#allocation7], %s343
        %s345 = sand.u32 %s241, 1
        %s346 = smul.addr %s345, 16
        %s347 = scalar_lea.vmem [#allocation6], %s346
        %p348 = scmp.lt.s32.totalorder %s27, 1
        %s349 = scalar_select %p348, %s27, 1
        %p350 = scmp.lt.s32.totalorder %s28, 0
        %s351 = scalar_select %p350, %s28, 0
        %s352 = smul.addr %s349, 2
        %s353 = sadd.s32 %s351, %s352
        %s354 = smul.addr %s353, 4
        %s355 = scalar_lea.vmem %s0, %s354
        %p357 = scmp.eq.s32.totalorder %s28, 0
        // Predicated region
        $region57: #{tpu_custom_call.1} parent=55 // pred_check
          %p358 = pneg %p357
        $region58: #{tpu_custom_call.1} parent=55 // pred_check_branch
          %360 = sbr.rel (%p358) target = $region60
        $region59: #{tpu_custom_call.1} parent=55 // pred_region
          %vm361 = vcmask 1044448
          %362 = vst.msk [vmem:[#allocation2] sm:$0xf] %vm361, 0
          %363 = vst.msk [vmem:[#allocation2 + $0x8] sm:$0xf] %vm361, 0
          %364 = vst.msk [vmem:[#allocation3] sm:$0xf] %vm361, 0
          %365 = vst.msk [vmem:[#allocation3 + $0x8] sm:$0xf] %vm361, 0
        $region60: #{tpu_custom_call.1} parent=55 // pred_fallthru
          _
        %p366 = scmp.gt.s32.totalorder %s28, 0
        // Predicated region
        $region61: #{tpu_custom_call.1} parent=55 // pred_check
          %p367 = pneg %p366
        $region62: #{tpu_custom_call.1} parent=55 // pred_check_branch
          %369 = sbr.rel (%p367) target = $region64
        $region63: #{tpu_custom_call.1} parent=55 // pred_region
          %v370 = vld [vmem:[#allocation2 + $0x4] sm:$0xf]
          %v371 = vld [vmem:[#allocation2 + $0xc] sm:$0xf]
          %vm372 = vcmask 1044448
          %373 = vst.msk [vmem:[#allocation2] sm:$0xf] %vm372, %v370
          %374 = vst.msk [vmem:[#allocation2 + $0x8] sm:$0xf] %vm372, %v371
          %v375 = vld [vmem:[#allocation3 + $0x4] sm:$0xf]
          %v376 = vld [vmem:[#allocation3 + $0xc] sm:$0xf]
          %377 = vst.msk [vmem:[#allocation3] sm:$0xf] %vm372, %v375
          %378 = vst.msk [vmem:[#allocation3 + $0x8] sm:$0xf] %vm372, %v376
        $region64: #{tpu_custom_call.1} parent=55 // pred_fallthru
          _
        %v379 = vld [vmem:[%s355] sm:$0xf]
        %v380 = vld [vmem:[%s355 + $0x4] sm:$0xf]
        %381 = vst [vmem:[#allocation2 + $0x4] sm:$0xf] %v379
        %382 = vst [vmem:[#allocation2 + $0xc] sm:$0xf] %v380
        %v383 = vld [vmem:[#allocation2] sm:$0xff]
        %v384 = vld [vmem:[#allocation2 + $0x8] sm:$0xff]
        %387 = vrot.lane.b32.xlu0 %v383, 4
        %v388 = vpop.permute.xlu0 %387
        %389 = vrot.lane.b32.xlu0 %v384, 4
        %v390 = vpop.permute.xlu0 %389
        %v391 = vrot.slane %v388, 4
        %v392 = vrot.slane %v390, 4
        %vm393 = vcmask 31744
        %v394 = vsel %vm393, %v388, %v391
        %v395 = vsel %vm393, %v390, %v392
        %398 = vst [vmem:[#allocation4] sm:$0xf] %v394
        %399 = vst [vmem:[#allocation4 + $0x4] sm:$0xf] %v395
        %v400 = vld [vmem:[#allocation2] sm:$0xff]
        %v401 = vld [vmem:[#allocation2 + $0x8] sm:$0xff]
        %404 = vrot.lane.b32.xlu0 %v400, 2
        %v405 = vpop.permute.xlu0 %404
        %406 = vrot.lane.b32.xlu0 %v401, 2
        %v407 = vpop.permute.xlu0 %406
        %v408 = vrot.slane %v405, 4
        %v409 = vrot.slane %v407, 4
        %vm410 = vcmask 15360
        %v411 = vsel %vm410, %v405, %v408
        %v412 = vsel %vm410, %v407, %v409
        %415 = vst [vmem:[#allocation4 + $0x8] sm:$0xf] %v411
        %416 = vst [vmem:[#allocation4 + $0xc] sm:$0xf] %v412
        %v417 = vld [vmem:[#allocation2 + $0x4] sm:$0xf]
        %v418 = vld [vmem:[#allocation2 + $0xc] sm:$0xf]
        %419 = vst [vmem:[#allocation4 + $0x10] sm:$0xf] %v417
        %420 = vst [vmem:[#allocation4 + $0x14] sm:$0xf] %v418
        %v421 = vld [vmem:[%s1] sm:$0xf]
        %v422 = vld [vmem:[%s1 + $0x4] sm:$0xf]
        %v423 = vld [vmem:[#allocation4] sm:$0xf]
        %v424 = vld [vmem:[#allocation4 + $0x4] sm:$0xf]
        %v425 = vld [vmem:[#allocation4 + $0x8] sm:$0xf]
        %v426 = vld [vmem:[#allocation4 + $0xc] sm:$0xf]
        %v427 = vld [vmem:[#allocation4 + $0x10] sm:$0xf]
        %v428 = vld [vmem:[#allocation4 + $0x14] sm:$0xf]
        %v431 = vunpack.c.l.b16 %v421
        %v432 = vunpack.c.l.b16 %v422
        %v433 = vpack.c.b16 %v432, %v431
        %v440 = vunpack.c.l.b16 %v423
        %v441 = vunpack.c.l.b16 %v424
        %v442 = vunpack.c.l.b16 %v425
        %v443 = vunpack.c.l.b16 %v426
        %v444 = vunpack.c.l.b16 %v427
        %v445 = vunpack.c.l.b16 %v428
        %v446 = vpack.c.b16 %v441, %v440
        %v447 = vpack.c.b16 %v443, %v442
        %v448 = vpack.c.b16 %v445, %v444
        %vm452 = vcmask 392192
        %v454 = vsel %vm452, %v433, 0
        %456 = vmatprep.subr.bf16.mxu0 0
        %457 = vmatpush1.bf16.msra.mxu0 0
        %458 = vmatprep.subr.bf16.mxu0 0
        %459 = vmatpush1.bf16.msra.mxu0 0
        %460 = vmatprep.subr.bf16.mxu0 0
        %461 = vmatpush1.bf16.msra.mxu0 0
        %462 = vmatprep.subr.bf16.mxu0 0
        %463 = vmatpush1.bf16.msra.mxu0 0
        %464 = vmatprep.subr.bf16.mxu0 0
        %465 = vmatpush1.bf16.msra.mxu0 0
        %466 = vmatprep.subr.bf16.mxu0 0
        %467 = vmatpush1.bf16.msra.mxu0 %v448
        %468 = vmatprep.subr.bf16.mxu0 0
        %469 = vmatpush1.bf16.msra.mxu0 %v447
        %470 = vmatprep.subr.bf16.mxu0 0
        %471 = vmatpush1.bf16.msra.mxu0 %v446
        %472 = vmatprep.subr.bf16.mxu0 0
        %473 = vmatpush2.bf16.msra.mxu0 0
        %474 = vmatprep.subr.bf16.mxu0 0
        %475 = vmatpush2.bf16.msra.mxu0 0
        %476 = vmatprep.subr.bf16.mxu0 0
        %477 = vmatpush2.bf16.msra.mxu0 0
        %478 = vmatprep.subr.bf16.mxu0 0
        %479 = vmatpush2.bf16.msra.mxu0 0
        %480 = vmatprep.subr.bf16.mxu0 0
        %481 = vmatpush2.bf16.msra.mxu0 0
        %482 = vmatprep.subr.bf16.mxu0 0
        %483 = vmatpush2.bf16.msra.mxu0 0
        %484 = vmatprep.subr.bf16.mxu0 0
        %485 = vmatpush2.bf16.msra.mxu0 0
        %486 = vmatprep.subr.bf16.mxu0 0
        %487 = vmatpush2.bf16.msra.mxu0 0
        %488 = vmatprep.mubr.bf16.mxu0 0
        %489 = vmatmul.mubr.bf16.gmra.mxu0 %v454
        %v490 = vpop.f32.mrf.mxu0
        %v491 = vadd.f32 0.0, %v490
        %v492 = vpop.f32.mrf.mxu0
        %v493 = vpop.f32.mrf.mxu0
        %v494 = vadd.f32 0.0, %v493
        %v495 = vpop.f32.mrf.mxu0
        %496 = vdwg.mxu0
        %v497 = vld [vmem:[%s2] sm:$0xff]
        %v498 = vld [vmem:[%s2 + $0x8] sm:$0xff]
        %500 = vset.pattern.permute.xlu0 0
        %501 = vperm.xlu0 %500, %v497
        %v502 = vpop.permute.xlu0 %501
        %505 = vset.pattern.permute.xlu0 0
        %506 = vperm.xlu0 %505, %v498
        %v507 = vpop.permute.xlu0 %506
        %v509 = vmul.f32 %v491, %v502
        %v510 = vmul.f32 %v494, %v507
        %v511 = vld [vmem:[%s3] sm:$0xff]
        %v512 = vld [vmem:[%s3 + $0x8] sm:$0xff]
        %514 = vset.pattern.permute.xlu0 0
        %515 = vperm.xlu0 %514, %v511
        %v516 = vpop.permute.xlu0 %515
        %519 = vset.pattern.permute.xlu0 0
        %520 = vperm.xlu0 %519, %v512
        %v521 = vpop.permute.xlu0 %520
        %v523 = vadd.f32 %v509, %v516
        %v524 = vadd.f32 %v510, %v521
        %v525 = vmax.f32 %v523, 0.0
        %v526 = vmax.f32 %v524, 0.0
        %v527 = vpack.c.bf16 %v526, %v525
        %v529 = vunpack.c.l.b16 %v527
        %v530 = vunpack.c.h.b16 %v527
        %v531 = vpack.c.b16 %v529, %v529
        %v532 = vpack.c.b16 %v530, %v530
        %535 = vst [vmem:[#allocation3 + $0x4] sm:$0xf] %v531
        %536 = vst [vmem:[#allocation3 + $0xc] sm:$0xf] %v532
        %v537 = vld [vmem:[#allocation3] sm:$0xff]
        %v538 = vld [vmem:[#allocation3 + $0x8] sm:$0xff]
        %541 = vrot.lane.b32.xlu0 %v537, 4
        %v542 = vpop.permute.xlu0 %541
        %543 = vrot.lane.b32.xlu0 %v538, 4
        %v544 = vpop.permute.xlu0 %543
        %v545 = vrot.slane %v542, 4
        %v546 = vrot.slane %v544, 4
        %v547 = vsel %vm393, %v542, %v545
        %v548 = vsel %vm393, %v544, %v546
        %551 = vst [vmem:[#allocation5] sm:$0xf] %v547
        %552 = vst [vmem:[#allocation5 + $0x4] sm:$0xf] %v548
        %v553 = vld [vmem:[#allocation3] sm:$0xff]
        %v554 = vld [vmem:[#allocation3 + $0x8] sm:$0xff]
        %557 = vrot.lane.b32.xlu0 %v553, 2
        %v558 = vpop.permute.xlu0 %557
        %559 = vrot.lane.b32.xlu0 %v554, 2
        %v560 = vpop.permute.xlu0 %559
        %v561 = vrot.slane %v558, 4
        %v562 = vrot.slane %v560, 4
        %v563 = vsel %vm410, %v558, %v561
        %v564 = vsel %vm410, %v560, %v562
        %567 = vst [vmem:[#allocation5 + $0x8] sm:$0xf] %v563
        %568 = vst [vmem:[#allocation5 + $0xc] sm:$0xf] %v564
        %v569 = vld [vmem:[#allocation3 + $0x4] sm:$0xf]
        %v570 = vld [vmem:[#allocation3 + $0xc] sm:$0xf]
        %571 = vst [vmem:[#allocation5 + $0x10] sm:$0xf] %v569
        %572 = vst [vmem:[#allocation5 + $0x14] sm:$0xf] %v570
        %v573 = vld [vmem:[%s4] sm:$0xf]
        %v574 = vld [vmem:[%s4 + $0x4] sm:$0xf]
        %v575 = vld [vmem:[#allocation5] sm:$0xf]
        %v576 = vld [vmem:[#allocation5 + $0x4] sm:$0xf]
        %v577 = vld [vmem:[#allocation5 + $0x8] sm:$0xf]
        %v578 = vld [vmem:[#allocation5 + $0xc] sm:$0xf]
        %v579 = vld [vmem:[#allocation5 + $0x10] sm:$0xf]
        %v580 = vld [vmem:[#allocation5 + $0x14] sm:$0xf]
        %v583 = vunpack.c.l.b16 %v573
        %v584 = vunpack.c.l.b16 %v574
        %v585 = vpack.c.b16 %v584, %v583
        %v592 = vunpack.c.l.b16 %v575
        %v593 = vunpack.c.l.b16 %v576
        %v594 = vunpack.c.l.b16 %v577
        %v595 = vunpack.c.l.b16 %v578
        %v596 = vunpack.c.l.b16 %v579
        %v597 = vunpack.c.l.b16 %v580
        %v598 = vpack.c.b16 %v593, %v592
        %v599 = vpack.c.b16 %v595, %v594
        %v600 = vpack.c.b16 %v597, %v596
        %v605 = vsel %vm452, %v585, 0
        %607 = vmatprep.subr.bf16.mxu0 0
        %608 = vmatpush1.bf16.msra.mxu0 0
        %609 = vmatprep.subr.bf16.mxu0 0
        %610 = vmatpush1.bf16.msra.mxu0 0
        %611 = vmatprep.subr.bf16.mxu0 0
        %612 = vmatpush1.bf16.msra.mxu0 0
        %613 = vmatprep.subr.bf16.mxu0 0
        %614 = vmatpush1.bf16.msra.mxu0 0
        %615 = vmatprep.subr.bf16.mxu0 0
        %616 = vmatpush1.bf16.msra.mxu0 0
        %617 = vmatprep.subr.bf16.mxu0 0
        %618 = vmatpush1.bf16.msra.mxu0 %v600
        %619 = vmatprep.subr.bf16.mxu0 0
        %620 = vmatpush1.bf16.msra.mxu0 %v599
        %621 = vmatprep.subr.bf16.mxu0 0
        %622 = vmatpush1.bf16.msra.mxu0 %v598
        %623 = vmatprep.subr.bf16.mxu0 0
        %624 = vmatpush2.bf16.msra.mxu0 0
        %625 = vmatprep.subr.bf16.mxu0 0
        %626 = vmatpush2.bf16.msra.mxu0 0
        %627 = vmatprep.subr.bf16.mxu0 0
        %628 = vmatpush2.bf16.msra.mxu0 0
        %629 = vmatprep.subr.bf16.mxu0 0
        %630 = vmatpush2.bf16.msra.mxu0 0
        %631 = vmatprep.subr.bf16.mxu0 0
        %632 = vmatpush2.bf16.msra.mxu0 0
        %633 = vmatprep.subr.bf16.mxu0 0
        %634 = vmatpush2.bf16.msra.mxu0 0
        %635 = vmatprep.subr.bf16.mxu0 0
        %636 = vmatpush2.bf16.msra.mxu0 0
        %637 = vmatprep.subr.bf16.mxu0 0
        %638 = vmatpush2.bf16.msra.mxu0 0
        %639 = vmatprep.mubr.bf16.mxu0 0
        %640 = vmatmul.mubr.bf16.gmra.mxu0 %v605
        %v641 = vpop.f32.mrf.mxu0
        %v642 = vadd.f32 0.0, %v641
        %v643 = vpop.f32.mrf.mxu0
        %v644 = vpop.f32.mrf.mxu0
        %v645 = vadd.f32 0.0, %v644
        %v646 = vpop.f32.mrf.mxu0
        %647 = vdwg.mxu0
        %v648 = vld [vmem:[%s5] sm:$0xff]
        %v649 = vld [vmem:[%s5 + $0x8] sm:$0xff]
        %651 = vset.pattern.permute.xlu0 0
        %652 = vperm.xlu0 %651, %v648
        %v653 = vpop.permute.xlu0 %652
        %656 = vset.pattern.permute.xlu0 0
        %657 = vperm.xlu0 %656, %v649
        %v658 = vpop.permute.xlu0 %657
        %v660 = vmul.f32 %v642, %v653
        %v661 = vmul.f32 %v645, %v658
        %v662 = vld [vmem:[%s6] sm:$0xff]
        %v663 = vld [vmem:[%s6 + $0x8] sm:$0xff]
        %665 = vset.pattern.permute.xlu0 0
        %666 = vperm.xlu0 %665, %v662
        %v667 = vpop.permute.xlu0 %666
        %670 = vset.pattern.permute.xlu0 0
        %671 = vperm.xlu0 %670, %v663
        %v672 = vpop.permute.xlu0 %671
        %v674 = vadd.f32 %v660, %v667
        %v675 = vadd.f32 %v661, %v672
        %v676 = vmax.f32 %v674, 0.0
        %v677 = vmax.f32 %v675, 0.0
        %v678 = vld [vmem:[%s7] sm:$0xf]
        %v679 = vld [vmem:[%s7 + $0x4] sm:$0xf]
        %v680 = vld [vmem:[%s355] sm:$0xf]
        %v681 = vld [vmem:[%s355 + $0x4] sm:$0xf]
        %v682 = vld [vmem:[%s8] sm:$0xff]
        %v683 = vld [vmem:[%s8 + $0x8] sm:$0xff]
        %685 = vset.pattern.permute.xlu0 0
        %686 = vperm.xlu0 %685, %v682
        %v687 = vpop.permute.xlu0 %686
        %690 = vset.pattern.permute.xlu0 0
        %691 = vperm.xlu0 %690, %v683
        %v692 = vpop.permute.xlu0 %691
        %v696 = vunpack.c.l.b16 %v678
        %v697 = vunpack.c.l.b16 %v679
        %v698 = vpack.c.b16 %v697, %v696
        %v701 = vunpack.c.l.b16 %v680
        %v702 = vunpack.c.l.b16 %v681
        %v703 = vpack.c.b16 %v702, %v701
        %vm705 = vcmask 130048
        %v707 = vsel %vm705, %v698, 0
        %709 = vmatprep.subr.bf16.mxu0 0
        %710 = vmatpush1.bf16.msra.mxu0 0
        %711 = vmatprep.subr.bf16.mxu0 0
        %712 = vmatpush1.bf16.msra.mxu0 0
        %713 = vmatprep.subr.bf16.mxu0 0
        %714 = vmatpush1.bf16.msra.mxu0 0
        %715 = vmatprep.subr.bf16.mxu0 0
        %716 = vmatpush1.bf16.msra.mxu0 0
        %717 = vmatprep.subr.bf16.mxu0 0
        %718 = vmatpush1.bf16.msra.mxu0 0
        %719 = vmatprep.subr.bf16.mxu0 0
        %720 = vmatpush1.bf16.msra.mxu0 0
        %721 = vmatprep.subr.bf16.mxu0 0
        %722 = vmatpush1.bf16.msra.mxu0 0
        %723 = vmatprep.subr.bf16.mxu0 0
        %724 = vmatpush1.bf16.msra.mxu0 %v703
        %725 = vmatprep.subr.bf16.mxu0 0
        %726 = vmatpush2.bf16.msra.mxu0 0
        %727 = vmatprep.subr.bf16.mxu0 0
        %728 = vmatpush2.bf16.msra.mxu0 0
        %729 = vmatprep.subr.bf16.mxu0 0
        %730 = vmatpush2.bf16.msra.mxu0 0
        %731 = vmatprep.subr.bf16.mxu0 0
        %732 = vmatpush2.bf16.msra.mxu0 0
        %733 = vmatprep.subr.bf16.mxu0 0
        %734 = vmatpush2.bf16.msra.mxu0 0
        %735 = vmatprep.subr.bf16.mxu0 0
        %736 = vmatpush2.bf16.msra.mxu0 0
        %737 = vmatprep.subr.bf16.mxu0 0
        %738 = vmatpush2.bf16.msra.mxu0 0
        %739 = vmatprep.subr.bf16.mxu0 0
        %740 = vmatpush2.bf16.msra.mxu0 0
        %741 = vmatprep.mubr.bf16.mxu0 0
        %742 = vmatmul.mubr.bf16.gmra.mxu0 %v707
        %v743 = vpop.f32.mrf.mxu0
        %v744 = vadd.f32 %v687, %v743
        %v745 = vpop.f32.mrf.mxu0
        %v746 = vpop.f32.mrf.mxu0
        %v747 = vadd.f32 %v692, %v746
        %v748 = vpop.f32.mrf.mxu0
        %749 = vdwg.mxu0
        %v750 = vadd.f32 %v676, %v744
        %v751 = vadd.f32 %v677, %v747
        %v752 = vmax.f32 %v750, 0.0
        %v753 = vmax.f32 %v751, 0.0
        %754 = vst [vmem:[%s347] sm:$0xff] %v752
        %755 = vst [vmem:[%s347 + $0x8] sm:$0xff] %v753
        %s756 = sand.u32 %s241, 1
        %s757 = scalar_lea.sflag [#allocation7], %s756
        %s758 = sand.u32 %s241, 1
        %s759 = smul.addr %s758, 16
        %s760 = scalar_lea.vmem [#allocation6], %s759
        // Predicated region
        $region65: #{tpu_custom_call.1} parent=55 // pred_check
          %p761 = pneg %p251
        $region66: #{tpu_custom_call.1} parent=55 // pred_check_branch
          %763 = sbr.rel (%p761) target = $region68
        $region67: #{tpu_custom_call.1} parent=55 // pred_region
          %s765 = ssub.s32 256, 256
          %766 = vsyncadd %s757, %s765
          %s767 = smul.addr %s27, 2
          %s768 = sadd.s32 %s28, %s767
          %s769 = smul.addr %s768, 128
          %s770 = scalar_lea.hbm %s9, %s769
          %s771 = sshll.u32 %s760, 4
          %s772 = int_to_ptr.vmem [resolvable:$true] %s771
          %777 = dma.vmem_to_hbm [thread:$0]  %s772, 256, %s770, %s757, 128, 128, 8
        $region68: #{tpu_custom_call.1} parent=55 // pred_fallthru
          _
      $region56: #{tpu_custom_call.1} parent=5 // pred_fallthru
        _
      %p778 = scmp.le.s32.totalorder 2, %s18
      // Predicated region
      $region69: #{tpu_custom_call.1} parent=5 // pred_check
        %p779 = pneg %p778
      $region70: #{tpu_custom_call.1} parent=5 // pred_check_branch
        %781 = sbr.rel (%p779) target = $region72
      $region71: #{tpu_custom_call.1} parent=5 // pred_region
        %s782 = ssub.s32 %s18, 2
        // Predicated region
        $region73: #{tpu_custom_call.1} parent=71 // pred_check
          %p783 = pneg %p257
        $region74: #{tpu_custom_call.1} parent=71 // pred_check_branch
          %785 = sbr.rel (%p783) target = $region76
        $region75: #{tpu_custom_call.1} parent=71 // pred_region
          %s786 = sand.u32 %s242, 1
          %s787 = scalar_lea.sflag [#allocation7], %s786
          %s788 = sand.u32 %s242, 1
          %s789 = smul.addr %s788, 16
          %s790 = scalar_lea.vmem [#allocation6], %s789
          %791 = dma.done %s787, 256
        $region76: #{tpu_custom_call.1} parent=71 // pred_fallthru
          _
      $region72: #{tpu_custom_call.1} parent=5 // pred_fallthru
        _
    $region6: #{tpu_custom_call.1} parent=1 // loop_footer
      %s22 = sadd.s32 1, %s18
    $region7: #{tpu_custom_call.1} parent=1 // loop_footer_branch
      %17 = sbr.rel target = $region3
    $region8: #{tpu_custom_call.1} parent=1 // loop_exit
      _
    %792 = vsyncpa [#allocation7], 1
    %s793 = scalar_lea.sflag [#allocation7], 1
    %794 = vsyncpa %s793, 1

</llo_original>
